<compile_context>
chip_gen: v6e
topology: v6e:2x2x1
jax: 0.10.0
libtpu: 0.0.40
codegen_flags: <defaults>
</compile_context>

<pallas_src>
import functools

import jax
import jax.numpy as jnp
from jax.experimental import pallas as pl
from jax.experimental.pallas import tpu as pltpu

LN_EPS = 1e-5  # PyTorch nn.LayerNorm default


def _layernorm(h, gamma, beta):
    mean = jnp.mean(h, axis=-1, keepdims=True)
    var = jnp.mean((h - mean) ** 2, axis=-1, keepdims=True)
    return (h - mean) * jax.lax.rsqrt(var + LN_EPS) * gamma + beta


def mdn_kernel(
    x_ref,                   # (tile_b, in_dim)  input rows
    w1_ref, w2_ref, wh_ref,  # resident weights: [in,hid], [hid,hid], [hid,out_pad]
    vec_ref,                 # resident (8, P) f32: rows = b1,g1,be1,b2,g2,be2,bh,0
    out_ref,                 # (tile_b, out_pad) lane-dense: [pi | mu | sigma | 0-pad]
    *, K, hid, out_pad,
):
    cd = w1_ref.dtype
    x = x_ref[...].astype(cd)          # cast-in-kernel: no wrapper-side XLA op for x

    # Static slices of the packed 1-row parameter slab (zero-cost ref views).
    b1 = vec_ref[0:1, 0:hid]
    g1 = vec_ref[1:2, 0:hid]
    be1 = vec_ref[2:3, 0:hid]
    b2 = vec_ref[3:4, 0:hid]
    g2 = vec_ref[4:5, 0:hid]
    be2 = vec_ref[5:6, 0:hid]
    bh = vec_ref[6:7, 0:out_pad]

    # --- block 1: Linear -> LayerNorm -> ReLU ---
    h = jnp.dot(x, w1_ref[...], preferred_element_type=jnp.float32) + b1
    h = jnp.maximum(_layernorm(h, g1, be1), 0.0)
    # TODO(synk): training-mode Dropout(0.2) omitted (eval semantics -> identity)

    # --- block 2 ---
    h = jnp.dot(h.astype(cd), w2_ref[...], preferred_element_type=jnp.float32) + b2
    h = jnp.maximum(_layernorm(h, g2, be2), 0.0)

    # --- fused heads: one lane-dense matmul; raw lanes = [pi logits | mu | log-sigma | 0]
    raw = jnp.dot(h.astype(cd), wh_ref[...], preferred_element_type=jnp.float32) + bh

    lane = jax.lax.broadcasted_iota(jnp.int32, raw.shape, dimension=1)

    # masked softmax over the first K lanes (padding lanes -> -inf -> exp == 0)
    logits = jnp.where(lane < K, raw, -jnp.inf)
    m = jnp.max(logits, axis=-1, keepdims=True)
    e = jnp.exp(logits - m)
    denom = jnp.sum(e, axis=-1, keepdims=True)
    inv = pl.reciprocal(denom, approx=True)   # EUP slot (VPU stays free)
    inv = inv * (2.0 - denom * inv)           # one Newton step -> full f32 accuracy
    pi = e * inv

    # softplus(s) + 0.001, numerically stable (computed on the whole slab, selected below)
    sp = jnp.logaddexp(raw, 0.0) + 0.001

    out = jnp.where(
        lane < K, pi,
        jnp.where(lane < 2 * K, raw,
                  jnp.where(lane < 3 * K, sp, 0.0)))
    out_ref[...] = out.astype(out_ref.dtype)


def prepare_params(params, *, compute_dtype=jnp.bfloat16):
    """One-time parameter prep (hoisted out of the per-call path):
       - fuse the three head Linears into one [hid, out_pad] weight,
       - pack all 1-row params (biases + LayerNorm affine + fused head bias) into a
         single resident (8, P) f32 slab,
       - cast matmul weights to `compute_dtype` (bf16 recommended on v5e/v6e/v7x)."""
    in_dim, hid = params["w1"].shape
    K = params["wpi"].shape[1]
    out_pad = max(128, ((3 * K + 127) // 128) * 128)
    P = max(hid, out_pad)
    cd = jnp.dtype(compute_dtype)

    wh = jnp.concatenate([params["wpi"], params["wmu"], params["wls"]], axis=1)
    wh = jnp.pad(wh, ((0, 0), (0, out_pad - 3 * K)))
    bh = jnp.concatenate([params["bpi"], params["bmu"], params["bls"]], axis=1)
    bh = jnp.pad(bh, ((0, 0), (0, out_pad - 3 * K)))

    def row(a, width):
        a = jnp.asarray(a, jnp.float32).reshape(1, -1)
        return jnp.pad(a, ((0, 0), (0, P - width)))

    vecs = jnp.concatenate([
        row(params["b1"], hid), row(params["g1"], hid), row(params["be1"], hid),
        row(params["b2"], hid), row(params["g2"], hid), row(params["be2"], hid),
        row(bh, out_pad), jnp.zeros((1, P), jnp.float32),
    ], axis=0)

    return dict(
        w1=params["w1"].astype(cd),
        w2=params["w2"].astype(cd),
        wh=wh.astype(cd),
        vecs=vecs,
        meta=dict(in_dim=int(in_dim), hid=int(hid), K=int(K), out_pad=int(out_pad)),
    )


def mdn_forward(x, prepped, *, tile_b=1024, num_cores=2, out_dtype=None):
    """Fused MDN forward on pre-prepared params (see prepare_params).
    out_dtype=None -> f32 output for f32 compute, bf16 output for bf16 compute
    (bf16 output halves the dominant HBM writeback stream at large B)."""
    meta = prepped["meta"]
    in_dim, hid, K, out_pad = meta["in_dim"], meta["hid"], meta["K"], meta["out_pad"]
    B = x.shape[0]
    assert x.shape[1] == in_dim

    if out_dtype is None:
        out_dtype = jnp.bfloat16 if prepped["w1"].dtype == jnp.bfloat16 else jnp.float32
    out_dtype = jnp.dtype(out_dtype)

    # Batch tile: as big as practical (multiple of 8); tiny B collapses to one grid
    # step; for medium/large B cap the tile so the grid has >= num_cores steps
    # (v7x has 2 TensorCores -- "parallel" only helps with >= 2 grid steps).
    b_ceil8 = ((B + 7) // 8) * 8
    tile_b = max(8, min(int(tile_b), b_ceil8))
    if num_cores > 1 and b_ceil8 >= 8 * num_cores:
        per_core = ((-(-B // num_cores)) + 7) // 8 * 8
        tile_b = min(tile_b, max(8, per_core))
    tile_b = ((tile_b + 7) // 8) * 8
    grid_b = pl.cdiv(B, tile_b)
    b_pad = grid_b * tile_b

    # TODO(synk): ragged last block (no pad) is possible; keep explicit pad until
    # validated on hardware. No-op when B is already a multiple of tile_b.
    x_p = x if b_pad == B else jnp.pad(x, ((0, b_pad - B), (0, 0)))

    def row_spec(cols):
        return pl.BlockSpec((tile_b, cols), lambda i: (i, 0))

    def full_spec(shape):
        # Constant index_map -> weights stay resident in VMEM across grid steps.
        # (If hid/out_pad are scaled up on v7x (64 MiB VMEM), add
        #  pipeline_mode=pl.Buffered(1) here and an explicit vmem_limit_bytes.)
        return pl.BlockSpec(shape, lambda i: (0, 0))

    P = prepped["vecs"].shape[1]
    fn = pl.pallas_call(
        functools.partial(mdn_kernel, K=K, hid=hid, out_pad=out_pad),
        out_shape=jax.ShapeDtypeStruct((b_pad, out_pad), out_dtype),
        grid=(grid_b,),
        in_specs=[
            row_spec(in_dim),                # x (cast to compute dtype inside kernel)
            full_spec((in_dim, hid)),        # w1
            full_spec((hid, hid)),           # w2
            full_spec((hid, out_pad)),       # fused head weights
            full_spec((8, P)),               # packed 1-row params
        ],
        out_specs=row_spec(out_pad),
        compiler_params=pltpu.CompilerParams(dimension_semantics=("parallel",)),
    )
    out = fn(x_p, prepped["w1"], prepped["w2"], prepped["wh"], prepped["vecs"])

    pi = out[:B, 0:K]
    mu = out[:B, K:2 * K]
    sigma = out[:B, 2 * K:3 * K]
    return pi, mu, sigma


def init_params(key, in_dim, hid, K):
    """Deterministic PyTorch-style uniform(-1/sqrt(fan_in), 1/sqrt(fan_in)) init."""
    keys = jax.random.split(key, 10)

    def lin(kw, kb, fan_in, fan_out):
        bound = 1.0 / jnp.sqrt(jnp.float32(fan_in))
        w = jax.random.uniform(kw, (fan_in, fan_out), jnp.float32, -bound, bound)
        b = jax.random.uniform(kb, (1, fan_out), jnp.float32, -bound, bound)
        return w, b

    w1, b1 = lin(keys[0], keys[1], in_dim, hid)
    w2, b2 = lin(keys[2], keys[3], hid, hid)
    wpi, bpi = lin(keys[4], keys[5], hid, K)
    wmu, bmu = lin(keys[6], keys[7], hid, K)
    wls, bls = lin(keys[8], keys[9], hid, K)
    return dict(
        w1=w1, b1=b1, g1=jnp.ones((1, hid), jnp.float32), be1=jnp.zeros((1, hid), jnp.float32),
        w2=w2, b2=b2, g2=jnp.ones((1, hid), jnp.float32), be2=jnp.zeros((1, hid), jnp.float32),
        wpi=wpi, bpi=bpi, wmu=wmu, bmu=bmu, wls=wls, bls=bls,
    )


def mdn_forward_ref(x, p):
    """Pure-JAX reference for correctness checking."""
    def ln(h, g, b):
        m = jnp.mean(h, -1, keepdims=True)
        v = jnp.mean((h - m) ** 2, -1, keepdims=True)
        return (h - m) * jax.lax.rsqrt(v + LN_EPS) * g + b

    h = jnp.maximum(ln(x @ p["w1"] + p["b1"], p["g1"], p["be1"]), 0.0)
    h = jnp.maximum(ln(h @ p["w2"] + p["b2"], p["g2"], p["be2"]), 0.0)
    pi = jax.nn.softmax(h @ p["wpi"] + p["bpi"], axis=-1)
    mu = h @ p["wmu"] + p["bmu"]
    sigma = jax.nn.softplus(h @ p["wls"] + p["bls"]) + 0.001
    return pi, mu, sigma


if __name__ == "__main__":
    B, in_dim, hid, K = 8, 16, 32, 4

    key = jax.random.PRNGKey(0)
    kx, kp, kx2 = jax.random.split(key, 3)
    x = jax.random.normal(kx, (B, in_dim), jnp.float32)
    params = init_params(kp, in_dim, hid, K)

    pi_r, mu_r, sigma_r = mdn_forward_ref(x, params)

    # --- f32 compute path: strict check against the pure-JAX reference ---
    prep_f32 = prepare_params(params, compute_dtype=jnp.float32)
    pi, mu, sigma = jax.block_until_ready(mdn_forward(x, prep_f32))
    assert pi.shape == (B, K) and mu.shape == (B, K) and sigma.shape == (B, K)
    assert pi.dtype == jnp.float32
    assert jnp.allclose(pi, pi_r, atol=1e-5), "pi mismatch"
    assert jnp.allclose(mu, mu_r, atol=1e-5), "mu mismatch"
    assert jnp.allclose(sigma, sigma_r, atol=1e-5), "sigma mismatch"
    assert jnp.allclose(jnp.sum(pi, -1), 1.0, atol=1e-5), "pi not normalized"

    # --- bf16 matmul-input + bf16-output path (recommended on v5e/v6e/v7x) ---
    prep_bf16 = prepare_params(params, compute_dtype=jnp.bfloat16)
    pi_b, mu_b, sigma_b = jax.block_until_ready(mdn_forward(x, prep_bf16))
    assert jnp.allclose(pi_b.astype(jnp.float32), pi_r, atol=1e-1), "bf16 pi mismatch"
    assert jnp.allclose(mu_b.astype(jnp.float32), mu_r, atol=1e-1), "bf16 mu mismatch"
    assert jnp.allclose(sigma_b.astype(jnp.float32), sigma_r, atol=1e-1), "bf16 sigma mismatch"
    assert jnp.all(jnp.isfinite(pi_b.astype(jnp.float32)))
    assert jnp.all(jnp.isfinite(sigma_b.astype(jnp.float32)))

    # --- larger, non-multiple-of-tile batch: exercises tiling, padding and the
    #     grid>=2 split (both v7x TensorCores fed) ---
    B2 = 530
    x2 = jax.random.normal(kx2, (B2, in_dim), jnp.float32)
    pi2, mu2, sigma2 = jax.block_until_ready(mdn_forward(x2, prep_f32))
    pi2_r, mu2_r, sigma2_r = mdn_forward_ref(x2, params)
    assert pi2.shape == (B2, K)
    assert jnp.allclose(pi2, pi2_r, atol=2e-5), "large-B pi mismatch"
    assert jnp.allclose(mu2, mu2_r, atol=2e-5), "large-B mu mismatch"
    assert jnp.allclose(sigma2, sigma2_r, atol=2e-5), "large-B sigma mismatch"

    print("KERNEL_OK")
</pallas_src>

<mosaic_0001>
module attributes {stable_mosaic.version = 11 : i64} {
  func.func @mdn_kernel(%arg0: i32, %arg1: memref<8x16xf32, #tpu.memory_space<vmem>>, %arg2: memref<16x32xf32, #tpu.memory_space<vmem>>, %arg3: memref<32x32xf32, #tpu.memory_space<vmem>>, %arg4: memref<32x128xf32, #tpu.memory_space<vmem>>, %arg5: memref<8x128xf32, #tpu.memory_space<vmem>>, %arg6: memref<8x128xf32, #tpu.memory_space<vmem>>) attributes {dimension_semantics = [#tpu.dimension_semantics<parallel>], iteration_bounds = array<i64: 1>, scalar_prefetch = 0 : i64, scratch_operands = 0 : i64, tpu.core_type = #tpu.core_type<tc>, window_params = [{transform_indices = @transform_0, window_bounds = array<i64: 8, 16>}, {pipeline_mode = #tpu.pipeline_mode<synchronous>, transform_indices = @transform_1, window_bounds = array<i64: 16, 32>}, {pipeline_mode = #tpu.pipeline_mode<synchronous>, transform_indices = @transform_2, window_bounds = array<i64: 32, 32>}, {pipeline_mode = #tpu.pipeline_mode<synchronous>, transform_indices = @transform_3, window_bounds = array<i64: 32, 128>}, {pipeline_mode = #tpu.pipeline_mode<synchronous>, transform_indices = @transform_4, window_bounds = array<i64: 8, 128>}, {transform_indices = @transform_5, window_bounds = array<i64: 8, 128>}]} {
    %c0 = arith.constant 0 : index
    %c0_0 = arith.constant 0 : index
    %0 = vector.load %arg1[%c0, %c0_0] : memref<8x16xf32, #tpu.memory_space<vmem>>, vector<8x16xf32>
    %c0_1 = arith.constant 0 : index
    %c0_2 = arith.constant 0 : index
    %1 = vector.load %arg5[%c0_1, %c0_2] : memref<8x128xf32, #tpu.memory_space<vmem>>, vector<1x32xf32>
    %c1 = arith.constant 1 : index
    %c0_3 = arith.constant 0 : index
    %2 = vector.load %arg5[%c1, %c0_3] : memref<8x128xf32, #tpu.memory_space<vmem>>, vector<1x32xf32>
    %c2 = arith.constant 2 : index
    %c0_4 = arith.constant 0 : index
    %3 = vector.load %arg5[%c2, %c0_4] : memref<8x128xf32, #tpu.memory_space<vmem>>, vector<1x32xf32>
    %c3 = arith.constant 3 : index
    %c0_5 = arith.constant 0 : index
    %4 = vector.load %arg5[%c3, %c0_5] : memref<8x128xf32, #tpu.memory_space<vmem>>, vector<1x32xf32>
    %c4 = arith.constant 4 : index
    %c0_6 = arith.constant 0 : index
    %5 = vector.load %arg5[%c4, %c0_6] : memref<8x128xf32, #tpu.memory_space<vmem>>, vector<1x32xf32>
    %c5 = arith.constant 5 : index
    %c0_7 = arith.constant 0 : index
    %6 = vector.load %arg5[%c5, %c0_7] : memref<8x128xf32, #tpu.memory_space<vmem>>, vector<1x32xf32>
    %c6 = arith.constant 6 : index
    %c0_8 = arith.constant 0 : index
    %7 = vector.load %arg5[%c6, %c0_8] : memref<8x128xf32, #tpu.memory_space<vmem>>, vector<1x128xf32>
    %c0_9 = arith.constant 0 : index
    %c0_10 = arith.constant 0 : index
    %8 = vector.load %arg2[%c0_9, %c0_10] : memref<16x32xf32, #tpu.memory_space<vmem>>, vector<16x32xf32>
    %cst = arith.constant dense<0.000000e+00> : vector<8x32xf32>
    %9 = tpu.matmul %0, %8, %cst {dimension_numbers = #tpu.dot_dimension_numbers<[1], [0], [0], [1], [0, 0, 1, 1], [], []>} : vector<8x16xf32>, vector<16x32xf32>, vector<8x32xf32> -> vector<8x32xf32>
    %10 = vector.broadcast %1 : vector<1x32xf32> to vector<8x32xf32>
    %11 = arith.addf %9, %10 : vector<8x32xf32>
    %cst_11 = arith.constant dense<0.000000e+00> : vector<8xf32>
    %12 = vector.multi_reduction <add>, %11, %cst_11 [1] : vector<8x32xf32> to vector<8xf32>
    %13 = vector.shape_cast %12 : vector<8xf32> to vector<8x1xf32>
    %cst_12 = arith.constant 3.200000e+01 : f32
    %14 = vector.broadcast %cst_12 : f32 to vector<8x1xf32>
    %15 = arith.divf %13, %14 : vector<8x1xf32>
    %16 = vector.broadcast %15 : vector<8x1xf32> to vector<8x32xf32>
    %17 = arith.subf %11, %16 : vector<8x32xf32>
    %18 = arith.mulf %17, %17 : vector<8x32xf32>
    %cst_13 = arith.constant dense<0.000000e+00> : vector<8xf32>
    %19 = vector.multi_reduction <add>, %18, %cst_13 [1] : vector<8x32xf32> to vector<8xf32>
    %20 = vector.shape_cast %19 : vector<8xf32> to vector<8x1xf32>
    %cst_14 = arith.constant 3.200000e+01 : f32
    %21 = vector.broadcast %cst_14 : f32 to vector<8x1xf32>
    %22 = arith.divf %20, %21 : vector<8x1xf32>
    %23 = vector.broadcast %15 : vector<8x1xf32> to vector<8x32xf32>
    %24 = arith.subf %11, %23 : vector<8x32xf32>
    %cst_15 = arith.constant 9.99999974E-6 : f32
    %25 = vector.broadcast %cst_15 : f32 to vector<8x1xf32>
    %26 = arith.addf %22, %25 : vector<8x1xf32>
    %27 = math.rsqrt %26 : vector<8x1xf32>
    %28 = vector.broadcast %27 : vector<8x1xf32> to vector<8x32xf32>
    %29 = arith.mulf %24, %28 : vector<8x32xf32>
    %30 = vector.broadcast %2 : vector<1x32xf32> to vector<8x32xf32>
    %31 = arith.mulf %29, %30 : vector<8x32xf32>
    %32 = vector.broadcast %3 : vector<1x32xf32> to vector<8x32xf32>
    %33 = arith.addf %31, %32 : vector<8x32xf32>
    %cst_16 = arith.constant 0.000000e+00 : f32
    %34 = vector.broadcast %cst_16 : f32 to vector<8x32xf32>
    %35 = arith.maximumf %33, %34 : vector<8x32xf32>
    %c0_17 = arith.constant 0 : index
    %c0_18 = arith.constant 0 : index
    %36 = vector.load %arg3[%c0_17, %c0_18] : memref<32x32xf32, #tpu.memory_space<vmem>>, vector<32x32xf32>
    %cst_19 = arith.constant dense<0.000000e+00> : vector<8x32xf32>
    %37 = tpu.matmul %35, %36, %cst_19 {dimension_numbers = #tpu.dot_dimension_numbers<[1], [0], [0], [1], [0, 0, 1, 1], [], []>} : vector<8x32xf32>, vector<32x32xf32>, vector<8x32xf32> -> vector<8x32xf32>
    %38 = vector.broadcast %4 : vector<1x32xf32> to vector<8x32xf32>
    %39 = arith.addf %37, %38 : vector<8x32xf32>
    %cst_20 = arith.constant dense<0.000000e+00> : vector<8xf32>
    %40 = vector.multi_reduction <add>, %39, %cst_20 [1] : vector<8x32xf32> to vector<8xf32>
    %41 = vector.shape_cast %40 : vector<8xf32> to vector<8x1xf32>
    %cst_21 = arith.constant 3.200000e+01 : f32
    %42 = vector.broadcast %cst_21 : f32 to vector<8x1xf32>
    %43 = arith.divf %41, %42 : vector<8x1xf32>
    %44 = vector.broadcast %43 : vector<8x1xf32> to vector<8x32xf32>
    %45 = arith.subf %39, %44 : vector<8x32xf32>
    %46 = arith.mulf %45, %45 : vector<8x32xf32>
    %cst_22 = arith.constant dense<0.000000e+00> : vector<8xf32>
    %47 = vector.multi_reduction <add>, %46, %cst_22 [1] : vector<8x32xf32> to vector<8xf32>
    %48 = vector.shape_cast %47 : vector<8xf32> to vector<8x1xf32>
    %cst_23 = arith.constant 3.200000e+01 : f32
    %49 = vector.broadcast %cst_23 : f32 to vector<8x1xf32>
    %50 = arith.divf %48, %49 : vector<8x1xf32>
    %51 = vector.broadcast %43 : vector<8x1xf32> to vector<8x32xf32>
    %52 = arith.subf %39, %51 : vector<8x32xf32>
    %cst_24 = arith.constant 9.99999974E-6 : f32
    %53 = vector.broadcast %cst_24 : f32 to vector<8x1xf32>
    %54 = arith.addf %50, %53 : vector<8x1xf32>
    %55 = math.rsqrt %54 : vector<8x1xf32>
    %56 = vector.broadcast %55 : vector<8x1xf32> to vector<8x32xf32>
    %57 = arith.mulf %52, %56 : vector<8x32xf32>
    %58 = vector.broadcast %5 : vector<1x32xf32> to vector<8x32xf32>
    %59 = arith.mulf %57, %58 : vector<8x32xf32>
    %60 = vector.broadcast %6 : vector<1x32xf32> to vector<8x32xf32>
    %61 = arith.addf %59, %60 : vector<8x32xf32>
    %cst_25 = arith.constant 0.000000e+00 : f32
    %62 = vector.broadcast %cst_25 : f32 to vector<8x32xf32>
    %63 = arith.maximumf %61, %62 : vector<8x32xf32>
    %c0_26 = arith.constant 0 : index
    %c0_27 = arith.constant 0 : index
    %64 = vector.load %arg4[%c0_26, %c0_27] : memref<32x128xf32, #tpu.memory_space<vmem>>, vector<32x128xf32>
    %cst_28 = arith.constant dense<0.000000e+00> : vector<8x128xf32>
    %65 = tpu.matmul %63, %64, %cst_28 {dimension_numbers = #tpu.dot_dimension_numbers<[1], [0], [0], [1], [0, 0, 1, 1], [], []>} : vector<8x32xf32>, vector<32x128xf32>, vector<8x128xf32> -> vector<8x128xf32>
    %66 = vector.broadcast %7 : vector<1x128xf32> to vector<8x128xf32>
    %67 = arith.addf %65, %66 : vector<8x128xf32>
    %68 = tpu.iota {dimensions = array<i32: 1>} : vector<8x128xi32>
    %c4_i32 = arith.constant 4 : i32
    %69 = vector.broadcast %c4_i32 : i32 to vector<8x128xi32>
    %70 = arith.cmpi slt, %68, %69 : vector<8x128xi32>
    %cst_29 = arith.constant 0xFF800000 : f32
    %71 = vector.broadcast %cst_29 : f32 to vector<8x128xf32>
    %72 = arith.select %70, %67, %71 : vector<8x128xi1>, vector<8x128xf32>
    %cst_30 = arith.constant dense<0xFF800000> : vector<8xf32>
    %73 = vector.multi_reduction <maximumf>, %72, %cst_30 [1] : vector<8x128xf32> to vector<8xf32>
    %74 = vector.shape_cast %73 : vector<8xf32> to vector<8x1xf32>
    %75 = vector.broadcast %74 : vector<8x1xf32> to vector<8x128xf32>
    %76 = arith.subf %72, %75 : vector<8x128xf32>
    %77 = math.exp %76 : vector<8x128xf32>
    %cst_31 = arith.constant dense<0.000000e+00> : vector<8xf32>
    %78 = vector.multi_reduction <add>, %77, %cst_31 [1] : vector<8x128xf32> to vector<8xf32>
    %79 = vector.shape_cast %78 : vector<8xf32> to vector<8x1xf32>
    %80 = tpu.reciprocal %79 {approx = true} : vector<8x1xf32> -> vector<8x1xf32>
    %81 = arith.mulf %79, %80 : vector<8x1xf32>
    %cst_32 = arith.constant 2.000000e+00 : f32
    %82 = vector.broadcast %cst_32 : f32 to vector<8x1xf32>
    %83 = arith.subf %82, %81 : vector<8x1xf32>
    %84 = arith.mulf %80, %83 : vector<8x1xf32>
    %85 = vector.broadcast %84 : vector<8x1xf32> to vector<8x128xf32>
    %86 = arith.mulf %77, %85 : vector<8x128xf32>
    %cst_33 = arith.constant 0.000000e+00 : f32
    %87 = vector.broadcast %cst_33 : f32 to vector<8x128xf32>
    %88 = arith.maximumf %67, %87 : vector<8x128xf32>
    %89 = vector.broadcast %cst_33 : f32 to vector<8x128xf32>
    %90 = arith.subf %67, %89 : vector<8x128xf32>
    %91 = arith.cmpf one, %90, %90 : vector<8x128xf32>
    %92 = vector.broadcast %cst_33 : f32 to vector<8x128xf32>
    %93 = arith.addf %67, %92 : vector<8x128xf32>
    %94 = math.absf %90 : vector<8x128xf32>
    %cst_34 = arith.constant 0.000000e+00 : f32
    %95 = vector.broadcast %cst_34 : f32 to vector<8x128xf32>
    %96 = arith.subf %95, %94 : vector<8x128xf32>
    %97 = math.exp %96 : vector<8x128xf32>
    %98 = math.log1p %97 : vector<8x128xf32>
    %99 = arith.addf %88, %98 : vector<8x128xf32>
    %100 = arith.select %91, %93, %99 : vector<8x128xi1>, vector<8x128xf32>
    %cst_35 = arith.constant 1.000000e-03 : f32
    %101 = vector.broadcast %cst_35 : f32 to vector<8x128xf32>
    %102 = arith.addf %100, %101 : vector<8x128xf32>
    %c4_i32_36 = arith.constant 4 : i32
    %103 = vector.broadcast %c4_i32_36 : i32 to vector<8x128xi32>
    %104 = arith.cmpi slt, %68, %103 : vector<8x128xi32>
    %c8_i32 = arith.constant 8 : i32
    %105 = vector.broadcast %c8_i32 : i32 to vector<8x128xi32>
    %106 = arith.cmpi slt, %68, %105 : vector<8x128xi32>
    %c12_i32 = arith.constant 12 : i32
    %107 = vector.broadcast %c12_i32 : i32 to vector<8x128xi32>
    %108 = arith.cmpi slt, %68, %107 : vector<8x128xi32>
    %cst_37 = arith.constant 0.000000e+00 : f32
    %109 = vector.broadcast %cst_37 : f32 to vector<8x128xf32>
    %110 = arith.select %108, %102, %109 : vector<8x128xi1>, vector<8x128xf32>
    %111 = arith.select %106, %67, %110 : vector<8x128xi1>, vector<8x128xf32>
    %112 = arith.select %104, %86, %111 : vector<8x128xi1>, vector<8x128xf32>
    %c0_38 = arith.constant 0 : index
    %c0_39 = arith.constant 0 : index
    %113 = vector.load %arg6[%c0_38, %c0_39] : memref<8x128xf32, #tpu.memory_space<vmem>>, vector<8x128xf32>
    tpu.vector_store %arg6[%c0_38, %c0_39], %112 {strides = array<i32>} : memref<8x128xf32, #tpu.memory_space<vmem>>, vector<8x128xf32>,
    return
  }
  func.func @transform_0(%arg0: i32) -> (i32, i32) {
    %c0_i32 = arith.constant 0 : i32
    %c0_i32_0 = arith.constant 0 : i32
    return %arg0, %c0_i32 : i32, i32
  }
  func.func @transform_1(%arg0: i32) -> (i32, i32) {
    %c0_i32 = arith.constant 0 : i32
    %c0_i32_0 = arith.constant 0 : i32
    %c0_i32_1 = arith.constant 0 : i32
    return %c0_i32, %c0_i32_0 : i32, i32
  }
  func.func @transform_2(%arg0: i32) -> (i32, i32) {
    %c0_i32 = arith.constant 0 : i32
    %c0_i32_0 = arith.constant 0 : i32
    %c0_i32_1 = arith.constant 0 : i32
    return %c0_i32, %c0_i32_0 : i32, i32
  }
  func.func @transform_3(%arg0: i32) -> (i32, i32) {
    %c0_i32 = arith.constant 0 : i32
    %c0_i32_0 = arith.constant 0 : i32
    %c0_i32_1 = arith.constant 0 : i32
    return %c0_i32, %c0_i32_0 : i32, i32
  }
  func.func @transform_4(%arg0: i32) -> (i32, i32) {
    %c0_i32 = arith.constant 0 : i32
    %c0_i32_0 = arith.constant 0 : i32
    %c0_i32_1 = arith.constant 0 : i32
    return %c0_i32, %c0_i32_0 : i32, i32
  }
  func.func @transform_5(%arg0: i32) -> (i32, i32) {
    %c0_i32 = arith.constant 0 : i32
    %c0_i32_0 = arith.constant 0 : i32
    return %arg0, %c0_i32 : i32, i32
  }
}

</mosaic_0001>

<llo_original>
// kernel: tpu_custom_call.1
$region0: #{tpu_custom_call.1}
  #allocation0 [shape = 'u32[]', space=smem, size = 0x4, offset = 0x4, fixed_abs, tag = 'smem constant byte address 0x4 - core index']
  #allocation1 [shape = 'u32[144,128]{1,0:T(1,128)}', space=vmem, size = 0x12000, scoped, tag = 'internal scratch']
  %s0 = inlined_call_operand.hbm [shape: f32[8,16], index: 0, kind: input, shape index: {}]
  %s1 = inlined_call_operand.hbm [shape: f32[16,32], index: 1, kind: input, shape index: {}]
  %s2 = inlined_call_operand.hbm [shape: f32[32,32], index: 2, kind: input, shape index: {}]
  %s3 = inlined_call_operand.hbm [shape: f32[32,128], index: 3, kind: input, shape index: {}]
  %s4 = inlined_call_operand.hbm [shape: f32[8,128], index: 4, kind: input, shape index: {}]
  %s5 = inlined_call_operand.hbm [shape: f32[8,128], index: 5, kind: output, shape index: {}]
  %s6 = sld [smem:[#allocation0]]
  $region50: #{tpu_custom_call.1} parent=0
    _
  %s8 = ssub.s32 1, %s6
  %s9 = scalar_select 0, %s8, %s6
  $region1: #{tpu_custom_call.1} parent=0
    #allocation2 [shape = 'u8[4096]{0}', space=vmem, size = 0x1000, scoped, tag = 'input window, operand 0, single buffered']
    #allocation3 [shape = 's32[1]{0}', space=sflag, size = 0x4, scoped, tag = 'scoped memory for tpu_custom_call.1']
    #allocation4 [shape = 's32[1]{0}', space=sflag, size = 0x4, scoped, tag = 'scoped memory for tpu_custom_call.1']
    #allocation5 [shape = 'u8[8192]{0}', space=vmem, size = 0x2000, scoped, tag = 'input window, operand 1, single buffered']
    #allocation6 [shape = 's32[1]{0}', space=sflag, size = 0x4, scoped, tag = 'scoped memory for tpu_custom_call.1']
    #allocation7 [shape = 'u8[16384]{0}', space=vmem, size = 0x4000, scoped, tag = 'input window, operand 2, single buffered']
    #allocation8 [shape = 'u8[16384]{0}', space=vmem, size = 0x4000, scoped, tag = 'input window, operand 3, single buffered']
    #allocation9 [shape = 's32[1]{0}', space=sflag, size = 0x4, scoped, tag = 'scoped memory for tpu_custom_call.1']
    #allocation10 [shape = 'u8[4096]{0}', space=vmem, size = 0x1000, scoped, tag = 'input window, operand 4, single buffered']
    #allocation11 [shape = 'u8[4096]{0}', space=vmem, size = 0x1000, scoped, tag = 'output window, operand 0, single buffered']
    %10 = vsyncpa [#allocation3], 0
    %11 = vsyncpa [#allocation6], 0
    %12 = vsyncpa [#allocation9], 0
    %13 = vsyncpa [#allocation4], 0
    // Predicated region
    $region2: #{tpu_custom_call.1} parent=1 // pred_check
      _
    $region3: #{tpu_custom_call.1} parent=1 // pred_check_branch
      %15 = sbr.rel (0) target = $region5
    $region4: #{tpu_custom_call.1} parent=1 // pred_region
      %s17 = ssub.s32 128, 128
      %18 = vsyncadd [#allocation3], %s17
      %s20 = sshll.u32 [#allocation2], 4
      %s21 = int_to_ptr.vmem [resolvable:$true] %s20
      %23 = dma.hbm_to_vmem [thread:$0]  %s0, 128, %s21, [#allocation3]
    $region5: #{tpu_custom_call.1} parent=1 // pred_fallthru
      _
    // Predicated region
    $region6: #{tpu_custom_call.1} parent=1 // pred_check
      _
    $region7: #{tpu_custom_call.1} parent=1 // pred_check_branch
      %25 = sbr.rel (0) target = $region9
    $region8: #{tpu_custom_call.1} parent=1 // pred_region
      %s27 = ssub.s32 256, 256
      %28 = vsyncadd [#allocation6], %s27
      %s29 = sshll.u32 [#allocation5], 4
      %s30 = int_to_ptr.vmem [resolvable:$true] %s29
      %35 = dma.hbm_to_vmem [thread:$0]  %s1, 256, %s30, [#allocation6], 128, 128, 8
    $region9: #{tpu_custom_call.1} parent=1 // pred_fallthru
      _
    // Predicated region
    $region10: #{tpu_custom_call.1} parent=1 // pred_check
      _
    $region11: #{tpu_custom_call.1} parent=1 // pred_check_branch
      %37 = sbr.rel (0) target = $region13
    $region12: #{tpu_custom_call.1} parent=1 // pred_region
      %s39 = ssub.s32 512, 512
      %40 = vsyncadd [#allocation6], %s39
      %s41 = sshll.u32 [#allocation7], 4
      %s42 = int_to_ptr.vmem [resolvable:$true] %s41
      %47 = dma.hbm_to_vmem [thread:$0]  %s2, 512, %s42, [#allocation6], 128, 128, 8
    $region13: #{tpu_custom_call.1} parent=1 // pred_fallthru
      _
    // Predicated region
    $region14: #{tpu_custom_call.1} parent=1 // pred_check
      _
    $region15: #{tpu_custom_call.1} parent=1 // pred_check_branch
      %49 = sbr.rel (0) target = $region17
    $region16: #{tpu_custom_call.1} parent=1 // pred_region
      %s51 = ssub.s32 512, 512
      %52 = vsyncadd [#allocation9], %s51
      %s53 = sshll.u32 [#allocation8], 4
      %s54 = int_to_ptr.vmem [resolvable:$true] %s53
      %59 = dma.hbm_to_vmem [thread:$0]  %s3, 512, %s54, [#allocation9], 128, 128, 8
    $region17: #{tpu_custom_call.1} parent=1 // pred_fallthru
      _
    // Predicated region
    $region18: #{tpu_custom_call.1} parent=1 // pred_check
      _
    $region19: #{tpu_custom_call.1} parent=1 // pred_check_branch
      %61 = sbr.rel (0) target = $region21
    $region20: #{tpu_custom_call.1} parent=1 // pred_region
      %s63 = ssub.s32 128, 128
      %64 = vsyncadd [#allocation9], %s63
      %s66 = sshll.u32 [#allocation10], 4
      %s67 = int_to_ptr.vmem [resolvable:$true] %s66
      %69 = dma.hbm_to_vmem [thread:$0]  %s4, 128, %s67, [#allocation9]
    $region21: #{tpu_custom_call.1} parent=1 // pred_fallthru
      _
    // Predicated region
    $region22: #{tpu_custom_call.1} parent=1 // pred_check
      _
    $region23: #{tpu_custom_call.1} parent=1 // pred_check_branch
      %71 = sbr.rel (0) target = $region25
    $region24: #{tpu_custom_call.1} parent=1 // pred_region
      %72 = dma.done [#allocation3], 128
    $region25: #{tpu_custom_call.1} parent=1 // pred_fallthru
      _
    // Predicated region
    $region26: #{tpu_custom_call.1} parent=1 // pred_check
      _
    $region27: #{tpu_custom_call.1} parent=1 // pred_check_branch
      %74 = sbr.rel (0) target = $region29
    $region28: #{tpu_custom_call.1} parent=1 // pred_region
      %75 = dma.done [#allocation6], 256
    $region29: #{tpu_custom_call.1} parent=1 // pred_fallthru
      _
    // Predicated region
    $region30: #{tpu_custom_call.1} parent=1 // pred_check
      _
    $region31: #{tpu_custom_call.1} parent=1 // pred_check_branch
      %77 = sbr.rel (0) target = $region33
    $region32: #{tpu_custom_call.1} parent=1 // pred_region
      %78 = dma.done [#allocation6], 512
    $region33: #{tpu_custom_call.1} parent=1 // pred_fallthru
      _
    // Predicated region
    $region34: #{tpu_custom_call.1} parent=1 // pred_check
      _
    $region35: #{tpu_custom_call.1} parent=1 // pred_check_branch
      %80 = sbr.rel (0) target = $region37
    $region36: #{tpu_custom_call.1} parent=1 // pred_region
      %81 = dma.done [#allocation9], 512
    $region37: #{tpu_custom_call.1} parent=1 // pred_fallthru
      _
    // Predicated region
    $region38: #{tpu_custom_call.1} parent=1 // pred_check
      _
    $region39: #{tpu_custom_call.1} parent=1 // pred_check_branch
      %83 = sbr.rel (0) target = $region41
    $region40: #{tpu_custom_call.1} parent=1 // pred_region
      %84 = dma.done [#allocation9], 128
    $region41: #{tpu_custom_call.1} parent=1 // pred_fallthru
      _
    %v85 = vld [vmem:[#allocation2] sm:$0xff]
    %v86 = vld [vmem:[#allocation10] sm:$0x1]
    %v87 = vld [vmem:[#allocation10 + $0x1] sm:$0x1]
    %v88 = vld [vmem:[#allocation10 + $0x2] sm:$0x1]
    %v89 = vld [vmem:[#allocation10 + $0x3] sm:$0x1]
    %v90 = vld [vmem:[#allocation10 + $0x4] sm:$0x1]
    %v91 = vld [vmem:[#allocation10 + $0x5] sm:$0x1]
    %v92 = vld [vmem:[#allocation10 + $0x6] sm:$0x1]
    %v93 = vld [vmem:[#allocation5] sm:$0xff]
    %v94 = vld [vmem:[#allocation5 + $0x8] sm:$0xff]
    %v95 = vlaneseq
    %v96 = vshrl.u32 %v95, 7
    %v97 = vsub.s32 0, %v96
    %v98 = vrot.slane %v86, %v97
    %vm99 = vcmask 130048
    %v101 = vsel %vm99, %v85, 0
    %103 = vmatprep.subr.mxu0 0.0
    %104 = vmatpush1.msra.mxu0 0.0
    %105 = vmatprep.subr.mxu0 0.0
    %106 = vmatpush1.msra.mxu0 0.0
    %107 = vmatprep.subr.mxu0 0.0
    %108 = vmatpush1.msra.mxu0 0.0
    %109 = vmatprep.subr.mxu0 0.0
    %110 = vmatpush1.msra.mxu0 0.0
    %111 = vmatprep.subr.mxu0 0.0
    %112 = vmatpush1.msra.mxu0 0.0
    %113 = vmatprep.subr.mxu0 0.0
    %114 = vmatpush1.msra.mxu0 0.0
    %115 = vmatprep.subr.mxu0 0.0
    %116 = vmatpush1.msra.mxu0 0.0
    %117 = vmatprep.subr.mxu0 0.0
    %118 = vmatpush1.msra.mxu0 0.0
    %119 = vmatprep.subr.mxu0 0.0
    %120 = vmatpush1.msra.mxu0 0.0
    %121 = vmatprep.subr.mxu0 0.0
    %122 = vmatpush1.msra.mxu0 0.0
    %123 = vmatprep.subr.mxu0 0.0
    %124 = vmatpush1.msra.mxu0 0.0
    %125 = vmatprep.subr.mxu0 0.0
    %126 = vmatpush1.msra.mxu0 0.0
    %127 = vmatprep.subr.mxu0 0.0
    %128 = vmatpush1.msra.mxu0 0.0
    %129 = vmatprep.subr.mxu0 0.0
    %130 = vmatpush1.msra.mxu0 0.0
    %131 = vmatprep.subr.mxu0 0.0
    %132 = vmatpush1.msra.mxu0 %v94
    %133 = vmatprep.subr.mxu0 0.0
    %134 = vmatpush1.msra.mxu0 %v93
    %135 = vmatprep.subr.mxu0 0.0
    %136 = vmatpush2.msra.mxu0 0.0
    %137 = vmatprep.subr.mxu0 0.0
    %138 = vmatpush2.msra.mxu0 0.0
    %139 = vmatprep.subr.mxu0 0.0
    %140 = vmatpush2.msra.mxu0 0.0
    %141 = vmatprep.subr.mxu0 0.0
    %142 = vmatpush2.msra.mxu0 0.0
    %143 = vmatprep.subr.mxu0 0.0
    %144 = vmatpush2.msra.mxu0 0.0
    %145 = vmatprep.subr.mxu0 0.0
    %146 = vmatpush2.msra.mxu0 0.0
    %147 = vmatprep.subr.mxu0 0.0
    %148 = vmatpush2.msra.mxu0 0.0
    %149 = vmatprep.subr.mxu0 0.0
    %150 = vmatpush2.msra.mxu0 0.0
    %151 = vmatprep.subr.mxu0 0.0
    %152 = vmatpush2.msra.mxu0 0.0
    %153 = vmatprep.subr.mxu0 0.0
    %154 = vmatpush2.msra.mxu0 0.0
    %155 = vmatprep.subr.mxu0 0.0
    %156 = vmatpush2.msra.mxu0 0.0
    %157 = vmatprep.subr.mxu0 0.0
    %158 = vmatpush2.msra.mxu0 0.0
    %159 = vmatprep.subr.mxu0 0.0
    %160 = vmatpush2.msra.mxu0 0.0
    %161 = vmatprep.subr.mxu0 0.0
    %162 = vmatpush2.msra.mxu0 0.0
    %163 = vmatprep.subr.mxu0 0.0
    %164 = vmatpush2.msra.mxu0 0.0
    %165 = vmatprep.subr.mxu0 0.0
    %166 = vmatpush2.msra.mxu0 0.0
    %167 = vmatprep.mubr.f32.mxu0 0.0
    %168 = vmatmul.mubr.f32.gmra.mxu0 %v101
    %v169 = vpop.f32.mrf.mxu0
    %v170 = vadd.f32 %v98, %v169
    %v171 = vpop.f32.mrf.mxu0
    %172 = vdwg.mxu0
    %vm173 = vcmask 261120
    %v174 = vsel %vm173, %v170, 0.0
    %175 = vadd.xlane.f32.xlu0 %v174
    %v176 = vpop.xlane.xlu0 %175
    %v177 = vrcp.pop 32.0
    %v178 = vmul.f32 %v176, %v177
    %v179 = vsub.f32 %v170, %v178
    %v180 = vmul.f32 %v179, %v179
    %v181 = vsel %vm173, %v180, 0.0
    %182 = vadd.xlane.f32.xlu0 %v181
    %v183 = vpop.xlane.xlu0 %182
    %v184 = vmul.f32 %v183, %v177
    %v185 = vadd.f32 %v184, 1e-05
    %v186 = vrsqrt.pop %v185
    %v187 = vmul.f32 %v179, %v186
    %v188 = vlaneseq
    %v189 = vshrl.u32 %v188, 7
    %v190 = vsub.s32 0, %v189
    %v191 = vrot.slane %v87, %v190
    %v192 = vmul.f32 %v187, %v191
    %v193 = vlaneseq
    %v194 = vshrl.u32 %v193, 7
    %v195 = vsub.s32 0, %v194
    %v196 = vrot.slane %v88, %v195
    %v197 = vadd.f32 %v192, %v196
    %v198 = vmax.f32 %v197, 0.0
    %v199 = vld [vmem:[#allocation7] sm:$0xff]
    %v200 = vld [vmem:[#allocation7 + $0x8] sm:$0xff]
    %v201 = vld [vmem:[#allocation7 + $0x10] sm:$0xff]
    %v202 = vld [vmem:[#allocation7 + $0x18] sm:$0xff]
    %v203 = vlaneseq
    %v204 = vshrl.u32 %v203, 7
    %v205 = vsub.s32 0, %v204
    %v206 = vrot.slane %v89, %v205
    %v208 = vsel %vm173, %v198, 0
    %210 = vmatprep.subr.mxu0 0.0
    %211 = vmatpush1.msra.mxu0 0.0
    %212 = vmatprep.subr.mxu0 0.0
    %213 = vmatpush1.msra.mxu0 0.0
    %214 = vmatprep.subr.mxu0 0.0
    %215 = vmatpush1.msra.mxu0 0.0
    %216 = vmatprep.subr.mxu0 0.0
    %217 = vmatpush1.msra.mxu0 0.0
    %218 = vmatprep.subr.mxu0 0.0
    %219 = vmatpush1.msra.mxu0 0.0
    %220 = vmatprep.subr.mxu0 0.0
    %221 = vmatpush1.msra.mxu0 0.0
    %222 = vmatprep.subr.mxu0 0.0
    %223 = vmatpush1.msra.mxu0 0.0
    %224 = vmatprep.subr.mxu0 0.0
    %225 = vmatpush1.msra.mxu0 0.0
    %226 = vmatprep.subr.mxu0 0.0
    %227 = vmatpush1.msra.mxu0 0.0
    %228 = vmatprep.subr.mxu0 0.0
    %229 = vmatpush1.msra.mxu0 0.0
    %230 = vmatprep.subr.mxu0 0.0
    %231 = vmatpush1.msra.mxu0 0.0
    %232 = vmatprep.subr.mxu0 0.0
    %233 = vmatpush1.msra.mxu0 0.0
    %234 = vmatprep.subr.mxu0 0.0
    %235 = vmatpush1.msra.mxu0 %v202
    %236 = vmatprep.subr.mxu0 0.0
    %237 = vmatpush1.msra.mxu0 %v201
    %238 = vmatprep.subr.mxu0 0.0
    %239 = vmatpush1.msra.mxu0 %v200
    %240 = vmatprep.subr.mxu0 0.0
    %241 = vmatpush1.msra.mxu0 %v199
    %242 = vmatprep.subr.mxu0 0.0
    %243 = vmatpush2.msra.mxu0 0.0
    %244 = vmatprep.subr.mxu0 0.0
    %245 = vmatpush2.msra.mxu0 0.0
    %246 = vmatprep.subr.mxu0 0.0
    %247 = vmatpush2.msra.mxu0 0.0
    %248 = vmatprep.subr.mxu0 0.0
    %249 = vmatpush2.msra.mxu0 0.0
    %250 = vmatprep.subr.mxu0 0.0
    %251 = vmatpush2.msra.mxu0 0.0
    %252 = vmatprep.subr.mxu0 0.0
    %253 = vmatpush2.msra.mxu0 0.0
    %254 = vmatprep.subr.mxu0 0.0
    %255 = vmatpush2.msra.mxu0 0.0
    %256 = vmatprep.subr.mxu0 0.0
    %257 = vmatpush2.msra.mxu0 0.0
    %258 = vmatprep.subr.mxu0 0.0
    %259 = vmatpush2.msra.mxu0 0.0
    %260 = vmatprep.subr.mxu0 0.0
    %261 = vmatpush2.msra.mxu0 0.0
    %262 = vmatprep.subr.mxu0 0.0
    %263 = vmatpush2.msra.mxu0 0.0
    %264 = vmatprep.subr.mxu0 0.0
    %265 = vmatpush2.msra.mxu0 0.0
    %266 = vmatprep.subr.mxu0 0.0
    %267 = vmatpush2.msra.mxu0 0.0
    %268 = vmatprep.subr.mxu0 0.0
    %269 = vmatpush2.msra.mxu0 0.0
    %270 = vmatprep.subr.mxu0 0.0
    %271 = vmatpush2.msra.mxu0 0.0
    %272 = vmatprep.subr.mxu0 0.0
    %273 = vmatpush2.msra.mxu0 0.0
    %274 = vmatprep.mubr.f32.mxu0 0.0
    %275 = vmatmul.mubr.f32.gmra.mxu0 %v208
    %v276 = vpop.f32.mrf.mxu0
    %v277 = vadd.f32 %v206, %v276
    %v278 = vpop.f32.mrf.mxu0
    %279 = vdwg.mxu0
    %v280 = vsel %vm173, %v277, 0.0
    %281 = vadd.xlane.f32.xlu0 %v280
    %v282 = vpop.xlane.xlu0 %281
    %v283 = vmul.f32 %v282, %v177
    %v284 = vsub.f32 %v277, %v283
    %v285 = vmul.f32 %v284, %v284
    %v286 = vsel %vm173, %v285, 0.0
    %287 = vadd.xlane.f32.xlu0 %v286
    %v288 = vpop.xlane.xlu0 %287
    %v289 = vmul.f32 %v288, %v177
    %v290 = vadd.f32 %v289, 1e-05
    %v291 = vrsqrt.pop %v290
    %v292 = vmul.f32 %v284, %v291
    %v293 = vlaneseq
    %v294 = vshrl.u32 %v293, 7
    %v295 = vsub.s32 0, %v294
    %v296 = vrot.slane %v90, %v295
    %v297 = vmul.f32 %v292, %v296
    %v298 = vlaneseq
    %v299 = vshrl.u32 %v298, 7
    %v300 = vsub.s32 0, %v299
    %v301 = vrot.slane %v91, %v300
    %v302 = vadd.f32 %v297, %v301
    %v303 = vmax.f32 %v302, 0.0
    %v304 = vld [vmem:[#allocation8] sm:$0xff]
    %v305 = vld [vmem:[#allocation8 + $0x8] sm:$0xff]
    %v306 = vld [vmem:[#allocation8 + $0x10] sm:$0xff]
    %v307 = vld [vmem:[#allocation8 + $0x18] sm:$0xff]
    %v308 = vlaneseq
    %v309 = vshrl.u32 %v308, 7
    %v310 = vsub.s32 0, %v309
    %v311 = vrot.slane %v92, %v310
    %v313 = vsel %vm173, %v303, 0
    %315 = vmatprep.subr.mxu0 0.0
    %316 = vmatpush1.msra.mxu0 0.0
    %317 = vmatprep.subr.mxu0 0.0
    %318 = vmatpush1.msra.mxu0 0.0
    %319 = vmatprep.subr.mxu0 0.0
    %320 = vmatpush1.msra.mxu0 0.0
    %321 = vmatprep.subr.mxu0 0.0
    %322 = vmatpush1.msra.mxu0 0.0
    %323 = vmatprep.subr.mxu0 0.0
    %324 = vmatpush1.msra.mxu0 0.0
    %325 = vmatprep.subr.mxu0 0.0
    %326 = vmatpush1.msra.mxu0 0.0
    %327 = vmatprep.subr.mxu0 0.0
    %328 = vmatpush1.msra.mxu0 0.0
    %329 = vmatprep.subr.mxu0 0.0
    %330 = vmatpush1.msra.mxu0 0.0
    %331 = vmatprep.subr.mxu0 0.0
    %332 = vmatpush1.msra.mxu0 0.0
    %333 = vmatprep.subr.mxu0 0.0
    %334 = vmatpush1.msra.mxu0 0.0
    %335 = vmatprep.subr.mxu0 0.0
    %336 = vmatpush1.msra.mxu0 0.0
    %337 = vmatprep.subr.mxu0 0.0
    %338 = vmatpush1.msra.mxu0 0.0
    %339 = vmatprep.subr.mxu0 0.0
    %340 = vmatpush1.msra.mxu0 %v307
    %341 = vmatprep.subr.mxu0 0.0
    %342 = vmatpush1.msra.mxu0 %v306
    %343 = vmatprep.subr.mxu0 0.0
    %344 = vmatpush1.msra.mxu0 %v305
    %345 = vmatprep.subr.mxu0 0.0
    %346 = vmatpush1.msra.mxu0 %v304
    %347 = vmatprep.subr.mxu0 0.0
    %348 = vmatpush2.msra.mxu0 0.0
    %349 = vmatprep.subr.mxu0 0.0
    %350 = vmatpush2.msra.mxu0 0.0
    %351 = vmatprep.subr.mxu0 0.0
    %352 = vmatpush2.msra.mxu0 0.0
    %353 = vmatprep.subr.mxu0 0.0
    %354 = vmatpush2.msra.mxu0 0.0
    %355 = vmatprep.subr.mxu0 0.0
    %356 = vmatpush2.msra.mxu0 0.0
    %357 = vmatprep.subr.mxu0 0.0
    %358 = vmatpush2.msra.mxu0 0.0
    %359 = vmatprep.subr.mxu0 0.0
    %360 = vmatpush2.msra.mxu0 0.0
    %361 = vmatprep.subr.mxu0 0.0
    %362 = vmatpush2.msra.mxu0 0.0
    %363 = vmatprep.subr.mxu0 0.0
    %364 = vmatpush2.msra.mxu0 0.0
    %365 = vmatprep.subr.mxu0 0.0
    %366 = vmatpush2.msra.mxu0 0.0
    %367 = vmatprep.subr.mxu0 0.0
    %368 = vmatpush2.msra.mxu0 0.0
    %369 = vmatprep.subr.mxu0 0.0
    %370 = vmatpush2.msra.mxu0 0.0
    %371 = vmatprep.subr.mxu0 0.0
    %372 = vmatpush2.msra.mxu0 0.0
    %373 = vmatprep.subr.mxu0 0.0
    %374 = vmatpush2.msra.mxu0 0.0
    %375 = vmatprep.subr.mxu0 0.0
    %376 = vmatpush2.msra.mxu0 0.0
    %377 = vmatprep.subr.mxu0 0.0
    %378 = vmatpush2.msra.mxu0 0.0
    %379 = vmatprep.mubr.f32.mxu0 0.0
    %380 = vmatmul.mubr.f32.gmra.mxu0 %v313
    %v381 = vpop.f32.mrf.mxu0
    %v382 = vadd.f32 %v311, %v381
    %v383 = vpop.f32.mrf.mxu0
    %384 = vdwg.mxu0
    %v385 = vlaneseq
    %v386 = vand.u32 %v385, 127
    %vm387 = vcmp.lt.s32.totalorder %v386, 4
    %v388 = vsel %vm387, %v382, -inf
    %389 = vmax.xlane.f32.xlu0 %v388
    %v390 = vpop.xlane.xlu0 %389
    %v391 = vsub.f32 %v388, %v390
    %v392 = vmul.f32 %v391, 1.442695
    %v393 = vpow.pop %v392
    %394 = vadd.xlane.f32.xlu0 %v393
    %v395 = vpop.xlane.xlu0 %394
    %v396 = vrcp.pop %v395
    %v397 = vmul.f32 %v395, %v396
    %v398 = vsub.f32 2.0, %v397
    %v399 = vmul.f32 %v396, %v398
    %v400 = vmul.f32 %v393, %v399
    %v401 = vmax.f32 %v382, 0.0
    %vm402 = vcmp.ne.f32.partialorder %v382, %v382
    %v403 = vadd.f32 %v382, 0.0
    %v404 = vand.u32 2147483647, %v382
    %v405 = vsub.f32 0.0, %v404
    %v406 = vmul.f32 %v405, 1.442695
    %v407 = vpow.pop %v406
    %v408 = vadd.f32 %v407, 1.0
    %v409 = vlog2.pop %v408
    %v410 = vmul.f32 %v409, 0.6931472
    %v411 = vmul.f32 -0.5, %v407
    %v412 = vadd.f32 %v411, 1.0
    %v413 = vmul.f32 %v412, %v407
    %v414 = vand.u32 2147483647, %v407
    %vm415 = vcmp.lt.f32.partialorder %v414, 0.0004427343
    %v416 = vsel %vm415, %v413, %v410
    %v417 = vadd.f32 %v401, %v416
    %v418 = vsel %vm402, %v403, %v417
    %v419 = vadd.f32 %v418, 0.001
    %vm420 = vcmp.lt.s32.totalorder %v386, 8
    %vm421 = vcmp.lt.s32.totalorder %v386, 12
    %v422 = vsel %vm421, %v419, 0.0
    %v423 = vsel %vm420, %v382, %v422
    %v424 = vsel %vm387, %v400, %v423
    %425 = vst [vmem:[#allocation11] sm:$0xff] %v424
    // Predicated region
    $region42: #{tpu_custom_call.1} parent=1 // pred_check
      _
    $region43: #{tpu_custom_call.1} parent=1 // pred_check_branch
      %427 = sbr.rel (0) target = $region45
    $region44: #{tpu_custom_call.1} parent=1 // pred_region
      %s429 = ssub.s32 128, 128
      %430 = vsyncadd [#allocation4], %s429
      %s432 = sshll.u32 [#allocation11], 4
      %s433 = int_to_ptr.vmem [resolvable:$true] %s432
      %435 = dma.vmem_to_hbm [thread:$0]  %s433, 128, %s5, [#allocation4]
    $region45: #{tpu_custom_call.1} parent=1 // pred_fallthru
      _
    // Predicated region
    $region46: #{tpu_custom_call.1} parent=1 // pred_check
      _
    $region47: #{tpu_custom_call.1} parent=1 // pred_check_branch
      %437 = sbr.rel (0) target = $region49
    $region48: #{tpu_custom_call.1} parent=1 // pred_region
      %438 = dma.done [#allocation4], 128
    $region49: #{tpu_custom_call.1} parent=1 // pred_fallthru
      _
    %439 = vsyncpa [#allocation3], 1
    %440 = vsyncpa [#allocation6], 1
    %441 = vsyncpa [#allocation9], 1
    %442 = vsyncpa [#allocation4], 1

</llo_original>
